<compile_context>
chip_gen: v7x
topology: tpu7x:2x2x1
jax: 0.10.0
libtpu: 0.0.40
codegen_flags: <defaults>
</compile_context>

<pallas_src>
import functools

import jax
import jax.numpy as jnp
from jax.experimental import pallas as pl
from jax.experimental.pallas import tpu as pltpu


def _block_kernel(x_ref, w1_ref, b1_ref, w2_ref, b2_ref, o_ref, *, mxu_dtype):
    """Feature-major Block:  o = tanh(W2 @ tanh(W1 @ X + b1) + b2).

    Per-grid-step shapes:
      x_ref : (in_N, TB)     batch tile on the 128-lane axis
      w1_ref: (width, in_N)  PyTorch nn.Linear layout (out_features, in_features)
      b1_ref: (width, 1)
      w2_ref: (out_N, width)
      b2_ref: (out_N, 1)
      o_ref : (out_N, TB)    lane-dense output tile
    """
    x = x_ref[...].astype(jnp.float32)            # (in_N, TB)
    w1 = w1_ref[...].astype(jnp.float32)          # (width, in_N)
    b1 = b1_ref[...].astype(jnp.float32)          # (width, 1)
    in_n = x.shape[0]

    # ---- Layer 1: K = in_N is tiny -> unrolled VPU broadcast-FMAs ----------
    if in_n <= 8:
        h = b1 + w1[:, 0:1] * x[0:1, :]
        for k in range(1, in_n):
            h = h + w1[:, k:k + 1] * x[k:k + 1, :]
    else:  # general fallback: use the MXU when the contraction is big enough
        h = jnp.dot(w1, x, preferred_element_type=jnp.float32) + b1
    h = jnp.tanh(h)                               # (width, TB), EUP

    # ---- Layer 2: (out_N, width) @ (width, TB) on the MXU -------------------
    # mxu_dtype=bf16 avoids f32xf32 MXU emulation (v6e/v7x); accumulate in f32.
    y = jnp.dot(w2_ref[...].astype(mxu_dtype), h.astype(mxu_dtype),
                preferred_element_type=jnp.float32)
    y = y + b2_ref[...].astype(jnp.float32)
    o_ref[...] = jnp.tanh(y).astype(o_ref.dtype)


def _pick_tile(batch, batch_tile):
    """Batch tile: multiple of 128 lanes, clamped to the padded batch size."""
    b128 = ((batch + 127) // 128) * 128
    tb = max(128, min((batch_tile // 128) * 128, b128))
    b_pad = ((batch + tb - 1) // tb) * tb
    return tb, b_pad


def _block_pallas(x_fm, w1, b1, w2, b2, *, tb, out_dtype, mxu_dtype):
    """Core pallas_call on a feature-major, tile-padded input (in_N, B_pad)."""
    in_n, b_pad = x_fm.shape
    width = w1.shape[0]
    out_n = w2.shape[0]
    assert b_pad % tb == 0

    out_dtype = x_fm.dtype if out_dtype is None else out_dtype
    mxu_dtype = w2.dtype if mxu_dtype is None else mxu_dtype

    b1_c = b1.reshape(width, 1)
    b2_c = b2.reshape(out_n, 1)

    elem_in = jnp.dtype(x_fm.dtype).itemsize
    elem_out = jnp.dtype(out_dtype).itemsize

    # Advisory cost hint so XLA schedules surrounding pad/transpose ops well.
    cost = pl.CostEstimate(
        flops=2 * b_pad * width * (in_n + out_n),
        transcendentals=b_pad * (width + out_n),
        bytes_accessed=b_pad * (in_n * elem_in + out_n * elem_out),
    )

    # Per-step VMEM: double-buffered x/out tiles + f32 hidden + resident params.
    vmem_need = (2 * tb * (in_n * elem_in + out_n * elem_out)
                 + 4 * width * tb
                 + 4 * (width * in_n + out_n * width + width + out_n))
    cp_kwargs = dict(dimension_semantics=("parallel",))
    if vmem_need > (14 << 20):  # only needed for very large caller-chosen tiles
        cp_kwargs["vmem_limit_bytes"] = min(int(2 * vmem_need), 64 << 20)

    kernel = functools.partial(_block_kernel, mxu_dtype=mxu_dtype)

    return pl.pallas_call(
        kernel,
        out_shape=jax.ShapeDtypeStruct((out_n, b_pad), out_dtype),
        grid_spec=pltpu.PrefetchScalarGridSpec(
            num_scalar_prefetch=0,
            grid=(b_pad // tb,),
            in_specs=[
                pl.BlockSpec((in_n, tb), lambda i: (0, i)),      # x tile
                pl.BlockSpec((width, in_n), lambda i: (0, 0)),   # W1 (resident)
                pl.BlockSpec((width, 1), lambda i: (0, 0)),      # b1 (resident)
                pl.BlockSpec((out_n, width), lambda i: (0, 0)),  # W2 (resident)
                pl.BlockSpec((out_n, 1), lambda i: (0, 0)),      # b2 (resident)
            ],
            out_specs=pl.BlockSpec((out_n, tb), lambda i: (0, i)),
        ),
        compiler_params=pltpu.CompilerParams(**cp_kwargs),
        cost_estimate=cost,
    )(x_fm, w1, b1_c, w2, b2_c)


def block_forward_fm(x_fm, w1, b1, w2, b2, *, batch_tile=8192,
                     out_dtype=None, mxu_dtype=None):
    """Feature-major Block forward (no transposes): x_fm (in_N, B) -> (out_N, B).

    This is the path a fused multi-Block Deep Ritz stack should use end-to-end
    so the batch-major <-> feature-major transposes never hit HBM.
    """
    in_n, batch = x_fm.shape
    tb, b_pad = _pick_tile(batch, batch_tile)
    if b_pad != batch:
        x_fm = jnp.pad(x_fm, ((0, 0), (0, b_pad - batch)))
    y_fm = _block_pallas(x_fm, w1, b1, w2, b2,
                         tb=tb, out_dtype=out_dtype, mxu_dtype=mxu_dtype)
    # NOTE: padded columns hold tanh(b)-garbage; slice before any reuse.
    return y_fm[:, :batch] if b_pad != batch else y_fm


def block_forward(x, w1, b1, w2, b2, *, batch_tile=8192,
                  out_dtype=None, mxu_dtype=None):
    """PyTorch-compatible Block forward: y = tanh(tanh(x @ W1.T + b1) @ W2.T + b2).

    x : (B, in_N)
    w1: (width, in_N),  b1: (width,)    (PyTorch nn.Linear parameter layout)
    w2: (out_N, width), b2: (out_N,)
    returns: (B, out_N)

    The batch-major transposes here exist only for spec parity with the
    PyTorch module; performance-sensitive callers should use block_forward_fm.
    """
    batch = x.shape[0]
    tb, b_pad = _pick_tile(batch, batch_tile)
    x_fm = jnp.pad(x.T, ((0, 0), (0, b_pad - batch)))       # (in_N, B_pad)
    y_fm = _block_pallas(x_fm, w1, b1, w2, b2,
                         tb=tb, out_dtype=out_dtype, mxu_dtype=mxu_dtype)
    return y_fm[:, :batch].T


def init_linear_params(key, fan_in, fan_out, dtype=jnp.float32):
    """torch.nn.Linear default init (uniform +-1/sqrt(fan_in)), PyTorch layout:
    weight (fan_out, fan_in), bias (fan_out,)."""
    kw, kb = jax.random.split(key)
    bound = 1.0 / (fan_in ** 0.5)
    w = jax.random.uniform(kw, (fan_out, fan_in), dtype, -bound, bound)
    b = jax.random.uniform(kb, (fan_out,), dtype, -bound, bound)
    return w, b


if __name__ == "__main__":
    # Small shapes consistent with the Deep Ritz block for van der Pol:
    # 2-D state input, width-32 hidden layer, 32-D block output.
    B, in_N, width, out_N = 8, 2, 32, 32

    key = jax.random.PRNGKey(0)
    kx, k1, k2 = jax.random.split(key, 3)

    x = jax.random.normal(kx, (B, in_N), jnp.float32)
    w1, b1 = init_linear_params(k1, in_N, width)
    w2, b2 = init_linear_params(k2, width, out_N)

    # Pure-JAX reference with identical semantics to the PyTorch Block.
    y_ref = jnp.tanh(jnp.tanh(x @ w1.T + b1) @ w2.T + b2)

    # 1) PyTorch-compatible path, f32 storage + f32 MXU: tight parity check.
    y = jax.block_until_ready(block_forward(x, w1, b1, w2, b2))
    assert y.shape == (B, out_N)
    assert jnp.allclose(y, y_ref, atol=2e-5, rtol=2e-5), float(
        jnp.max(jnp.abs(y - y_ref))
    )

    # 2) Feature-major end-to-end path (no wrapper transpose), bf16 output
    #    storage + bf16 MXU inputs (f32 accumulation, f32 tanh) — the
    #    HBM-traffic-optimized configuration from the performance review.
    y_fm = jax.block_until_ready(
        block_forward_fm(x.T, w1, b1, w2, b2,
                         out_dtype=jnp.bfloat16, mxu_dtype=jnp.bfloat16)
    )
    assert y_fm.shape == (out_N, B)
    assert jnp.allclose(y_fm.astype(jnp.float32).T, y_ref,
                        atol=3e-2, rtol=3e-2), float(
        jnp.max(jnp.abs(y_fm.astype(jnp.float32).T - y_ref))
    )

    print("KERNEL_OK")
</pallas_src>

<mosaic_0001>
module attributes {stable_mosaic.version = 11 : i64} {
  func.func @_block_kernel(%arg0: i32, %arg1: memref<2x128xf32, #tpu.memory_space<vmem>>, %arg2: memref<32x2xf32, #tpu.memory_space<vmem>>, %arg3: memref<32x1xf32, #tpu.memory_space<vmem>>, %arg4: memref<32x32xf32, #tpu.memory_space<vmem>>, %arg5: memref<32x1xf32, #tpu.memory_space<vmem>>, %arg6: memref<32x128xf32, #tpu.memory_space<vmem>>) attributes {dimension_semantics = [#tpu.dimension_semantics<parallel>], iteration_bounds = array<i64: 1>, scalar_prefetch = 0 : i64, scratch_operands = 0 : i64, tpu.core_type = #tpu.core_type<tc>, window_params = [{transform_indices = @transform_0, window_bounds = array<i64: 2, 128>}, {pipeline_mode = #tpu.pipeline_mode<synchronous>, transform_indices = @transform_1, window_bounds = array<i64: 32, 2>}, {pipeline_mode = #tpu.pipeline_mode<synchronous>, transform_indices = @transform_2, window_bounds = array<i64: 32, 1>}, {pipeline_mode = #tpu.pipeline_mode<synchronous>, transform_indices = @transform_3, window_bounds = array<i64: 32, 32>}, {pipeline_mode = #tpu.pipeline_mode<synchronous>, transform_indices = @transform_4, window_bounds = array<i64: 32, 1>}, {transform_indices = @transform_5, window_bounds = array<i64: 32, 128>}]} {
    %c0 = arith.constant 0 : index
    %c0_0 = arith.constant 0 : index
    %0 = vector.load %arg1[%c0, %c0_0] : memref<2x128xf32, #tpu.memory_space<vmem>>, vector<2x128xf32>
    %c0_1 = arith.constant 0 : index
    %c0_2 = arith.constant 0 : index
    %1 = vector.load %arg2[%c0_1, %c0_2] : memref<32x2xf32, #tpu.memory_space<vmem>>, vector<32x2xf32>
    %c0_3 = arith.constant 0 : index
    %c0_4 = arith.constant 0 : index
    %2 = vector.load %arg3[%c0_3, %c0_4] : memref<32x1xf32, #tpu.memory_space<vmem>>, vector<32x1xf32>
    %3 = vector.extract_strided_slice %1 {offsets = [0, 0], sizes = [32, 1], strides = [1, 1]} : vector<32x2xf32> to vector<32x1xf32>
    %4 = vector.extract_strided_slice %0 {offsets = [0, 0], sizes = [1, 128], strides = [1, 1]} : vector<2x128xf32> to vector<1x128xf32>
    %5 = vector.broadcast %3 : vector<32x1xf32> to vector<32x128xf32>
    %6 = vector.broadcast %4 : vector<1x128xf32> to vector<32x128xf32>
    %7 = arith.mulf %5, %6 : vector<32x128xf32>
    %8 = vector.broadcast %2 : vector<32x1xf32> to vector<32x128xf32>
    %9 = arith.addf %8, %7 : vector<32x128xf32>
    %10 = vector.extract_strided_slice %1 {offsets = [0, 1], sizes = [32, 1], strides = [1, 1]} : vector<32x2xf32> to vector<32x1xf32>
    %11 = vector.extract_strided_slice %0 {offsets = [1, 0], sizes = [1, 128], strides = [1, 1]} : vector<2x128xf32> to vector<1x128xf32>
    %12 = vector.broadcast %10 : vector<32x1xf32> to vector<32x128xf32>
    %13 = vector.broadcast %11 : vector<1x128xf32> to vector<32x128xf32>
    %14 = arith.mulf %12, %13 : vector<32x128xf32>
    %15 = arith.addf %9, %14 : vector<32x128xf32>
    %16 = math.tanh %15 : vector<32x128xf32>
    %c0_5 = arith.constant 0 : index
    %c0_6 = arith.constant 0 : index
    %17 = vector.load %arg4[%c0_5, %c0_6] : memref<32x32xf32, #tpu.memory_space<vmem>>, vector<32x32xf32>
    %cst = arith.constant dense<0.000000e+00> : vector<32x128xf32>
    %18 = tpu.matmul %17, %16, %cst {dimension_numbers = #tpu.dot_dimension_numbers<[1], [0], [0], [1], [0, 0, 1, 1], [], []>} : vector<32x32xf32>, vector<32x128xf32>, vector<32x128xf32> -> vector<32x128xf32>
    %c0_7 = arith.constant 0 : index
    %c0_8 = arith.constant 0 : index
    %19 = vector.load %arg5[%c0_7, %c0_8] : memref<32x1xf32, #tpu.memory_space<vmem>>, vector<32x1xf32>
    %20 = vector.broadcast %19 : vector<32x1xf32> to vector<32x128xf32>
    %21 = arith.addf %18, %20 : vector<32x128xf32>
    %22 = math.tanh %21 : vector<32x128xf32>
    %c0_9 = arith.constant 0 : index
    %c0_10 = arith.constant 0 : index
    %23 = vector.load %arg6[%c0_9, %c0_10] : memref<32x128xf32, #tpu.memory_space<vmem>>, vector<32x128xf32>
    tpu.vector_store %arg6[%c0_9, %c0_10], %22 {strides = array<i32>} : memref<32x128xf32, #tpu.memory_space<vmem>>, vector<32x128xf32>,
    return
  }
  func.func @transform_0(%arg0: i32) -> (i32, i32) {
    %c0_i32 = arith.constant 0 : i32
    %c0_i32_0 = arith.constant 0 : i32
    return %c0_i32, %arg0 : i32, i32
  }
  func.func @transform_1(%arg0: i32) -> (i32, i32) {
    %c0_i32 = arith.constant 0 : i32
    %c0_i32_0 = arith.constant 0 : i32
    %c0_i32_1 = arith.constant 0 : i32
    return %c0_i32, %c0_i32_0 : i32, i32
  }
  func.func @transform_2(%arg0: i32) -> (i32, i32) {
    %c0_i32 = arith.constant 0 : i32
    %c0_i32_0 = arith.constant 0 : i32
    %c0_i32_1 = arith.constant 0 : i32
    return %c0_i32, %c0_i32_0 : i32, i32
  }
  func.func @transform_3(%arg0: i32) -> (i32, i32) {
    %c0_i32 = arith.constant 0 : i32
    %c0_i32_0 = arith.constant 0 : i32
    %c0_i32_1 = arith.constant 0 : i32
    return %c0_i32, %c0_i32_0 : i32, i32
  }
  func.func @transform_4(%arg0: i32) -> (i32, i32) {
    %c0_i32 = arith.constant 0 : i32
    %c0_i32_0 = arith.constant 0 : i32
    %c0_i32_1 = arith.constant 0 : i32
    return %c0_i32, %c0_i32_0 : i32, i32
  }
  func.func @transform_5(%arg0: i32) -> (i32, i32) {
    %c0_i32 = arith.constant 0 : i32
    %c0_i32_0 = arith.constant 0 : i32
    return %c0_i32, %arg0 : i32, i32
  }
}

</mosaic_0001>

<llo_original>
// kernel: tpu_custom_call.1
$region0: #{tpu_custom_call.1}
  #allocation0 [shape = 'u32[]', space=smem, size = 0x4, offset = 0x4, fixed_abs, tag = 'smem constant byte address 0x4 - core index']
  #allocation1 [shape = 'u32[144,128]{1,0:T(1,128)}', space=vmem, size = 0x12000, scoped, tag = 'internal scratch']
  %s0 = inlined_call_operand.vmem [shape: f32[2,128], index: 0, kind: input, shape index: {}]
  %s1 = inlined_call_operand.vmem [shape: f32[32,2], index: 1, kind: input, shape index: {}]
  %s2 = inlined_call_operand.vmem [shape: f32[32,1], index: 2, kind: input, shape index: {}]
  %s3 = inlined_call_operand.vmem [shape: f32[32,32], index: 3, kind: input, shape index: {}]
  %s4 = inlined_call_operand.vmem [shape: f32[32,1], index: 4, kind: input, shape index: {}]
  %s5 = inlined_call_operand.hbm [shape: f32[32,128], index: 5, kind: output, shape index: {}]
  %s6 = sld [smem:[#allocation0]]
  $region30: #{tpu_custom_call.1} parent=0
    _
  %s8 = ssub.s32 1, %s6
  %s9 = scalar_select 0, %s8, %s6
  $region1: #{tpu_custom_call.1} parent=0
    #allocation2 [shape = 'u8[16384]{0}', space=vmem, size = 0x4000, scoped, tag = 'output window, operand 0, single buffered']
    #allocation3 [shape = 's32[1]{0}', space=sflag, size = 0x4, scoped, tag = 'scoped memory for tpu_custom_call.1']
    %10 = vsyncpa [#allocation3], 0
    // Predicated region
    $region2: #{tpu_custom_call.1} parent=1 // pred_check
      _
    $region3: #{tpu_custom_call.1} parent=1 // pred_check_branch
      %12 = sbr.rel (0) target = $region5
    $region4: #{tpu_custom_call.1} parent=1 // pred_region
      _
    $region5: #{tpu_custom_call.1} parent=1 // pred_fallthru
      _
    // Predicated region
    $region6: #{tpu_custom_call.1} parent=1 // pred_check
      _
    $region7: #{tpu_custom_call.1} parent=1 // pred_check_branch
      %14 = sbr.rel (0) target = $region9
    $region8: #{tpu_custom_call.1} parent=1 // pred_region
      _
    $region9: #{tpu_custom_call.1} parent=1 // pred_fallthru
      _
    // Predicated region
    $region10: #{tpu_custom_call.1} parent=1 // pred_check
      _
    $region11: #{tpu_custom_call.1} parent=1 // pred_check_branch
      %16 = sbr.rel (0) target = $region13
    $region12: #{tpu_custom_call.1} parent=1 // pred_region
      _
    $region13: #{tpu_custom_call.1} parent=1 // pred_fallthru
      _
    // Predicated region
    $region14: #{tpu_custom_call.1} parent=1 // pred_check
      _
    $region15: #{tpu_custom_call.1} parent=1 // pred_check_branch
      %18 = sbr.rel (0) target = $region17
    $region16: #{tpu_custom_call.1} parent=1 // pred_region
      _
    $region17: #{tpu_custom_call.1} parent=1 // pred_fallthru
      _
    // Predicated region
    $region18: #{tpu_custom_call.1} parent=1 // pred_check
      _
    $region19: #{tpu_custom_call.1} parent=1 // pred_check_branch
      %20 = sbr.rel (0) target = $region21
    $region20: #{tpu_custom_call.1} parent=1 // pred_region
      _
    $region21: #{tpu_custom_call.1} parent=1 // pred_fallthru
      _
    %v21 = vld [vmem:[%s0] sm:$0x3]
    %v22 = vld [vmem:[%s1] sm:$0xff]
    %v23 = vld [vmem:[%s1 + $0x8] sm:$0xff]
    %v24 = vld [vmem:[%s1 + $0x10] sm:$0xff]
    %v25 = vld [vmem:[%s1 + $0x18] sm:$0xff]
    %v26 = vld [vmem:[%s2] sm:$0xff]
    %v27 = vld [vmem:[%s2 + $0x8] sm:$0xff]
    %v28 = vld [vmem:[%s2 + $0x10] sm:$0xff]
    %v29 = vld [vmem:[%s2 + $0x18] sm:$0xff]
    %31 = vset.pattern.permute.xlu0 0
    %32 = vperm.xlu0 %31, %v22
    %v33 = vpop.permute.xlu0 %32
    %36 = vset.pattern.permute.xlu0 0
    %37 = vperm.xlu0 %36, %v23
    %v38 = vpop.permute.xlu0 %37
    %41 = vset.pattern.permute.xlu0 0
    %42 = vperm.xlu0 %41, %v24
    %v43 = vpop.permute.xlu0 %42
    %46 = vset.pattern.permute.xlu0 0
    %47 = vperm.xlu0 %46, %v25
    %v48 = vpop.permute.xlu0 %47
    %v50 = vlaneseq
    %v51 = vshrl.u32 %v50, 7
    %v52 = vsub.s32 0, %v51
    %v53 = vrot.slane %v21, %v52
    %v54 = vmul.f32 %v33, %v53
    %v55 = vmul.f32 %v38, %v53
    %v56 = vmul.f32 %v43, %v53
    %v57 = vmul.f32 %v48, %v53
    %59 = vset.pattern.permute.xlu0 0
    %60 = vperm.xlu0 %59, %v26
    %v61 = vpop.permute.xlu0 %60
    %64 = vset.pattern.permute.xlu0 0
    %65 = vperm.xlu0 %64, %v27
    %v66 = vpop.permute.xlu0 %65
    %69 = vset.pattern.permute.xlu0 0
    %70 = vperm.xlu0 %69, %v28
    %v71 = vpop.permute.xlu0 %70
    %74 = vset.pattern.permute.xlu0 0
    %75 = vperm.xlu0 %74, %v29
    %v76 = vpop.permute.xlu0 %75
    %v78 = vadd.f32 %v61, %v54
    %v79 = vadd.f32 %v66, %v55
    %v80 = vadd.f32 %v71, %v56
    %v81 = vadd.f32 %v76, %v57
    %82 = vset.pattern.permute.xlu0 1
    %83 = vperm.xlu0 %82, %v22
    %v84 = vpop.permute.xlu0 %83
    %86 = vset.pattern.permute.xlu0 1
    %87 = vperm.xlu0 %86, %v23
    %v88 = vpop.permute.xlu0 %87
    %90 = vset.pattern.permute.xlu0 1
    %91 = vperm.xlu0 %90, %v24
    %v92 = vpop.permute.xlu0 %91
    %94 = vset.pattern.permute.xlu0 1
    %95 = vperm.xlu0 %94, %v25
    %v96 = vpop.permute.xlu0 %95
    %v98 = vlaneseq
    %v99 = vshrl.u32 %v98, 7
    %v100 = vsub.s32 1, %v99
    %v101 = vrot.slane %v21, %v100
    %v102 = vmul.f32 %v84, %v101
    %v103 = vmul.f32 %v88, %v101
    %v104 = vmul.f32 %v92, %v101
    %v105 = vmul.f32 %v96, %v101
    %v106 = vadd.f32 %v78, %v102
    %v107 = vadd.f32 %v79, %v103
    %v108 = vadd.f32 %v80, %v104
    %v109 = vadd.f32 %v81, %v105
    %v110 = vtanh.pop %v106
    %v111 = vtanh.pop %v107
    %v112 = vtanh.pop %v108
    %v113 = vtanh.pop %v109
    %v114 = vld [vmem:[%s3] sm:$0xff]
    %v115 = vld [vmem:[%s3 + $0x8] sm:$0xff]
    %v116 = vld [vmem:[%s3 + $0x10] sm:$0xff]
    %v117 = vld [vmem:[%s3 + $0x18] sm:$0xff]
    %v118 = vld [vmem:[%s4] sm:$0xff]
    %v119 = vld [vmem:[%s4 + $0x8] sm:$0xff]
    %v120 = vld [vmem:[%s4 + $0x10] sm:$0xff]
    %v121 = vld [vmem:[%s4 + $0x18] sm:$0xff]
    %123 = vset.pattern.permute.xlu0 0
    %124 = vperm.xlu0 %123, %v118
    %v125 = vpop.permute.xlu0 %124
    %128 = vset.pattern.permute.xlu0 0
    %129 = vperm.xlu0 %128, %v119
    %v130 = vpop.permute.xlu0 %129
    %133 = vset.pattern.permute.xlu0 0
    %134 = vperm.xlu0 %133, %v120
    %v135 = vpop.permute.xlu0 %134
    %138 = vset.pattern.permute.xlu0 0
    %139 = vperm.xlu0 %138, %v121
    %v140 = vpop.permute.xlu0 %139
    %vm142 = vcmask 261120
    %v144 = vsel %vm142, %v114, 0
    %v147 = vsel %vm142, %v115, 0
    %v150 = vsel %vm142, %v116, 0
    %v153 = vsel %vm142, %v117, 0
    %155 = vmatprep.subr.mxu0 0.0
    %156 = vmatpush1.msra.mxu0 %v110
    %157 = vmatprep.subr.mxu0 0.0
    %158 = vmatpush1.msra.mxu0 %v111
    %159 = vmatprep.subr.mxu0 0.0
    %160 = vmatpush1.msra.mxu0 %v112
    %161 = vmatprep.subr.mxu0 0.0
    %162 = vmatpush1.msra.mxu0 %v113
    %163 = vmatprep.subr.mxu0 0.0
    %164 = vmatpush1.msra.mxu0 0.0
    %165 = vmatprep.subr.mxu0 0.0
    %166 = vmatpush1.msra.mxu0 0.0
    %167 = vmatprep.subr.mxu0 0.0
    %168 = vmatpush1.msra.mxu0 0.0
    %169 = vmatprep.subr.mxu0 0.0
    %170 = vmatpush1.msra.mxu0 0.0
    %171 = vmatprep.subr.mxu0 0.0
    %172 = vmatpush1.msra.mxu0 0.0
    %173 = vmatprep.subr.mxu0 0.0
    %174 = vmatpush1.msra.mxu0 0.0
    %175 = vmatprep.subr.mxu0 0.0
    %176 = vmatpush1.msra.mxu0 0.0
    %177 = vmatprep.subr.mxu0 0.0
    %178 = vmatpush1.msra.mxu0 0.0
    %179 = vmatprep.subr.mxu0 0.0
    %180 = vmatpush1.msra.mxu0 0.0
    %181 = vmatprep.subr.mxu0 0.0
    %182 = vmatpush1.msra.mxu0 0.0
    %183 = vmatprep.subr.mxu0 0.0
    %184 = vmatpush1.msra.mxu0 0.0
    %185 = vmatprep.subr.mxu0 0.0
    %186 = vmatpush1.msra.mxu0 0.0
    %187 = vmatprep.subr.mxu0 0.0
    %188 = vmatpush1.msra.mxu0 0.0
    %189 = vmatprep.subr.mxu0 0.0
    %190 = vmatpush1.msra.mxu0 0.0
    %191 = vmatprep.subr.mxu0 0.0
    %192 = vmatpush1.msra.mxu0 0.0
    %193 = vmatprep.subr.mxu0 0.0
    %194 = vmatpush1.msra.mxu0 0.0
    %195 = vmatprep.subr.mxu0 0.0
    %196 = vmatpush1.msra.mxu0 0.0
    %197 = vmatprep.subr.mxu0 0.0
    %198 = vmatpush1.msra.mxu0 0.0
    %199 = vmatprep.subr.mxu0 0.0
    %200 = vmatpush1.msra.mxu0 0.0
    %201 = vmatprep.subr.mxu0 0.0
    %202 = vmatpush1.msra.mxu0 0.0
    %203 = vmatprep.subr.mxu0 0.0
    %204 = vmatpush1.msra.mxu0 0.0
    %205 = vmatprep.subr.mxu0 0.0
    %206 = vmatpush1.msra.mxu0 0.0
    %207 = vmatprep.subr.mxu0 0.0
    %208 = vmatpush1.msra.mxu0 0.0
    %209 = vmatprep.subr.mxu0 0.0
    %210 = vmatpush1.msra.mxu0 0.0
    %211 = vmatprep.subr.mxu0 0.0
    %212 = vmatpush1.msra.mxu0 0.0
    %213 = vmatprep.subr.mxu0 0.0
    %214 = vmatpush1.msra.mxu0 0.0
    %215 = vmatprep.subr.mxu0 0.0
    %216 = vmatpush1.msra.mxu0 0.0
    %217 = vmatprep.subr.mxu0 0.0
    %218 = vmatpush1.msra.mxu0 0.0
    %219 = vmatprep.mubr.f32.mxu0 0.0
    %220 = vmatmul.mubr.f32.gmra.mrb[0].mxu0 %v144
    %v221 = vpop.f32.mrb[0].mxu0
    %v222 = vadd.f32 %v125, %v221
    %v223 = vpop.f32.mrb[0].mxu0
    %224 = vmatprep.mubr.f32.mxu0 0.0
    %225 = vmatmul.mubr.f32.gmra.mrb[0].mxu0 %v147
    %v226 = vpop.f32.mrb[0].mxu0
    %v227 = vadd.f32 %v130, %v226
    %v228 = vpop.f32.mrb[0].mxu0
    %229 = vmatprep.mubr.f32.mxu0 0.0
    %230 = vmatmul.mubr.f32.gmra.mrb[0].mxu0 %v150
    %v231 = vpop.f32.mrb[0].mxu0
    %v232 = vadd.f32 %v135, %v231
    %v233 = vpop.f32.mrb[0].mxu0
    %234 = vmatprep.mubr.f32.mxu0 0.0
    %235 = vmatmul.mubr.f32.gmra.mrb[0].mxu0 %v153
    %v236 = vpop.f32.mrb[0].mxu0
    %v237 = vadd.f32 %v140, %v236
    %v238 = vpop.f32.mrb[0].mxu0
    %239 = vdwg.mxu0
    %v240 = vtanh.pop %v222
    %v241 = vtanh.pop %v227
    %v242 = vtanh.pop %v232
    %v243 = vtanh.pop %v237
    %244 = vst [vmem:[#allocation2] sm:$0xff] %v240
    %245 = vst [vmem:[#allocation2 + $0x8] sm:$0xff] %v241
    %246 = vst [vmem:[#allocation2 + $0x10] sm:$0xff] %v242
    %247 = vst [vmem:[#allocation2 + $0x18] sm:$0xff] %v243
    // Predicated region
    $region22: #{tpu_custom_call.1} parent=1 // pred_check
      _
    $region23: #{tpu_custom_call.1} parent=1 // pred_check_branch
      %249 = sbr.rel (0) target = $region25
    $region24: #{tpu_custom_call.1} parent=1 // pred_region
      %s251 = ssub.s32 512, 512
      %252 = vsyncadd [#allocation3], %s251
      %s253 = sshll.u32 [#allocation2], 4
      %s254 = int_to_ptr.vmem [resolvable:$true] %s253
      %259 = dma.vmem_to_hbm [thread:$0]  %s254, 512, %s5, [#allocation3], 128, 128, 8
    $region25: #{tpu_custom_call.1} parent=1 // pred_fallthru
      _
    // Predicated region
    $region26: #{tpu_custom_call.1} parent=1 // pred_check
      _
    $region27: #{tpu_custom_call.1} parent=1 // pred_check_branch
      %261 = sbr.rel (0) target = $region29
    $region28: #{tpu_custom_call.1} parent=1 // pred_region
      %262 = dma.done [#allocation3], 512
    $region29: #{tpu_custom_call.1} parent=1 // pred_fallthru
      _
    %263 = vsyncpa [#allocation3], 1

</llo_original>
